<compile_context>
chip_gen: v7x
topology: tpu7x:2x2x1
jax: 0.10.0
libtpu: 0.0.40
codegen_flags: <defaults>
</compile_context>

<pallas_src>
import numpy as np
import jax
import jax.numpy as jnp
from jax.experimental import pallas as pl
from jax.experimental.pallas import tpu as pltpu

_LANE = 128
_SUBLANE = 16          # bf16 sublane tile height
_ROW_BLOCK_MAX = 512   # max rows per grid step (keeps per-step VMEM tiny)


def _leaky_relu(x, slope=0.01):
    # F.leaky_relu default negative_slope = 0.01
    return jnp.where(x > 0, x, slope * x)


def _round_up(x, m):
    return (x + m - 1) // m * m


# ---------------------------------------------------------------------------
# Kernel: three lane-dense matmuls over the block-diagonally packed weights.
# ---------------------------------------------------------------------------
def fusion_kernel(x_ref, w1_ref, w2_ref, w3_ref, out_ref):
    h = jnp.dot(x_ref[...], w1_ref[...], preferred_element_type=jnp.float32)
    h = _leaky_relu(h).astype(w2_ref.dtype)
    h = jnp.dot(h, w2_ref[...], preferred_element_type=jnp.float32)
    h = _leaky_relu(h).astype(w3_ref.dtype)
    out_ref[...] = jnp.dot(h, w3_ref[...],
                           preferred_element_type=jnp.float32
                           ).astype(out_ref.dtype)


# ---------------------------------------------------------------------------
# One-time parameter preprocessing (hoisted out of the per-call path).
# ---------------------------------------------------------------------------
def prepare_fusion_params(params, dims, h_feats, num_classes,
                          dtype=jnp.bfloat16):
    """Builds block-diagonal, bias-folded, lane-dense weight matrices.

    params: list of (W1 (D_m,H), b1 (H,), W2 (H,H), b2 (H,), W3 (H,C), b3 (C,))
    dims:   list of per-modality input widths D_m (same order as params).
    Zero-padded rows/columns provably contribute 0 through every layer, so the
    packed computation is exact w.r.t. the unpacked one (up to dtype).
    """
    M = len(params)
    H, C = h_feats, num_classes
    D_total = int(sum(dims))
    Dp = _round_up(D_total + 1, _LANE)   # +1: constant-1 column (bias folding)
    Kp = _round_up(M * H + 1, _LANE)     # +1: constant-1 column in hidden acts
    Cp = _round_up(M * C, _LANE)

    w1 = np.zeros((Dp, Kp), np.float32)
    w2 = np.zeros((Kp, Kp), np.float32)
    w3 = np.zeros((Kp, Cp), np.float32)

    off = 0
    for m, ((W1, b1, W2, b2, W3, b3), d) in enumerate(zip(params, dims)):
        W1 = np.asarray(W1); b1 = np.asarray(b1)
        W2 = np.asarray(W2); b2 = np.asarray(b2)
        W3 = np.asarray(W3); b3 = np.asarray(b3)
        w1[off:off + d,       m * H:(m + 1) * H] = W1
        w1[D_total,           m * H:(m + 1) * H] = b1   # bias row (hit by 1-col)
        w2[m * H:(m + 1) * H, m * H:(m + 1) * H] = W2
        w2[M * H,             m * H:(m + 1) * H] = b2
        w3[m * H:(m + 1) * H, m * C:(m + 1) * C] = W3
        w3[M * H,             m * C:(m + 1) * C] = b3
        off += d
    # Keep the constant-1 column alive through layers 1 and 2 (LeakyReLU(1)=1).
    w1[D_total, M * H] = 1.0
    w2[M * H,   M * H] = 1.0

    return dict(
        w1=jnp.asarray(w1, dtype), w2=jnp.asarray(w2, dtype),
        w3=jnp.asarray(w3, dtype),
        D_total=D_total, Dp=Dp, Kp=Kp, Cp=Cp,
        M=M, H=H, C=C, dtype=dtype,
    )


# ---------------------------------------------------------------------------
# Per-call forward.
# ---------------------------------------------------------------------------
def metric_fusion_forward(feats_list, packed):
    """feats_list: list of (N, D_m) arrays (modality order matches `packed`).
    Returns (proj (M, N, C) float32, fused (N, C) float32)."""
    M, C = packed["M"], packed["C"]
    D_total, Dp, Kp, Cp = (packed["D_total"], packed["Dp"],
                           packed["Kp"], packed["Cp"])
    dtype = packed["dtype"]
    N = feats_list[0].shape[0]

    # Rows: pad to the bf16 sublane tile; block further for large N so the row
    # axis can be gridded ("parallel" -> usable by both v7x TensorCores).
    Np = _round_up(N, _SUBLANE)
    row_block = min(Np, _ROW_BLOCK_MAX)
    Np = _round_up(Np, row_block)

    # Pack activations: concat modalities on the lane axis, append the
    # constant-1 column used for bias folding, zero-pad to (Np, Dp).
    x_cat = jnp.concatenate([x.astype(dtype) for x in feats_list], axis=1)
    ones = jnp.ones((N, 1), dtype)
    x_aug = jnp.concatenate([x_cat, ones], axis=1)           # (N, D_total+1)
    x_pad = jnp.pad(x_aug, ((0, Np - N), (0, Dp - (D_total + 1))))

    out_p = pl.pallas_call(
        fusion_kernel,
        out_shape=jax.ShapeDtypeStruct((Np, Cp), jnp.float32),
        grid=(Np // row_block,),
        in_specs=[
            pl.BlockSpec((row_block, Dp), lambda i: (i, 0)),
            pl.BlockSpec((Dp, Kp), lambda i: (0, 0)),  # weights stay resident
            pl.BlockSpec((Kp, Kp), lambda i: (0, 0)),
            pl.BlockSpec((Kp, Cp), lambda i: (0, 0)),
        ],
        out_specs=pl.BlockSpec((row_block, Cp), lambda i: (i, 0)),
        compiler_params=pltpu.CompilerParams(
            dimension_semantics=("parallel",)),
    )(x_pad, packed["w1"], packed["w2"], packed["w3"])

    # Column blocks [m*C:(m+1)*C] hold modality m's projection.
    blocks = out_p[:N, :M * C].reshape(N, M, C)
    proj = jnp.transpose(blocks, (1, 0, 2))                  # (M, N, C)
    fused = blocks.sum(axis=1) / M                           # (N, C)
    return proj, fused


# ---------------------------------------------------------------------------
# Init / reference.
# ---------------------------------------------------------------------------
def _init_linear(key, fan_in, fan_out):
    # nn.Linear default: U(-1/sqrt(fan_in), 1/sqrt(fan_in)) for W and b.
    kw, kb = jax.random.split(key)
    bound = 1.0 / (fan_in ** 0.5)
    W = jax.random.uniform(kw, (fan_in, fan_out), jnp.float32, -bound, bound)
    b = jax.random.uniform(kb, (fan_out,), jnp.float32, -bound, bound)
    return W, b


def reference_forward(feats_list, params, num_classes):
    """Pure-JAX f32 reference mirroring the PyTorch forward."""
    M = len(feats_list)
    N = feats_list[0].shape[0]
    features = jnp.zeros((N, num_classes), jnp.float32)
    proj = []
    for x, (W1, b1, W2, b2, W3, b3) in zip(feats_list, params):
        h = _leaky_relu(x @ W1 + b1)
        h = _leaky_relu(h @ W2 + b2)
        h = h @ W3 + b3
        proj.append(h)
        features = features + h
    return jnp.stack(proj), features / M


if __name__ == "__main__":
    # Small shapes consistent with the module's forward.
    modality_dict = {"clinical": 16, "imaging": 24, "genomic": 32}
    h_feats = 32
    num_classes = 4
    N = 8                               # batch size
    M = len(modality_dict)

    key = jax.random.PRNGKey(0)
    keys = jax.random.split(key, 4 * M)

    feats_list, params, dims = [], [], []
    for k, (name, dim) in enumerate(modality_dict.items()):
        kx, k1, k2, k3 = keys[4 * k:4 * k + 4]
        x = jax.random.normal(kx, (N, dim), jnp.float32)
        W1, b1 = _init_linear(k1, dim, h_feats)
        W2, b2 = _init_linear(k2, h_feats, h_feats)
        W3, b3 = _init_linear(k3, h_feats, num_classes)
        feats_list.append(x)
        params.append((W1, b1, W2, b2, W3, b3))
        dims.append(dim)

    # One-time parameter packing (hoisted out of the forward path).
    packed = prepare_fusion_params(params, dims, h_feats, num_classes)

    proj, out = metric_fusion_forward(feats_list, packed)
    jax.block_until_ready((proj, out))

    proj_ref, out_ref = reference_forward(feats_list, params, num_classes)
    # bf16 weights/activations (f32 accumulation) -> relaxed tolerances.
    assert jnp.allclose(proj, proj_ref, atol=5e-2, rtol=5e-2), "proj mismatch"
    assert jnp.allclose(out, out_ref, atol=5e-2, rtol=5e-2), "fused out mismatch"

    print("KERNEL_OK")
</pallas_src>

<mosaic_0001>
module attributes {stable_mosaic.version = 11 : i64} {
  func.func @fusion_kernel(%arg0: i32, %arg1: memref<16x128xbf16, #tpu.memory_space<vmem>>, %arg2: memref<128x128xbf16, #tpu.memory_space<vmem>>, %arg3: memref<128x128xbf16, #tpu.memory_space<vmem>>, %arg4: memref<128x128xbf16, #tpu.memory_space<vmem>>, %arg5: memref<16x128xf32, #tpu.memory_space<vmem>>) attributes {dimension_semantics = [#tpu.dimension_semantics<parallel>], iteration_bounds = array<i64: 1>, scalar_prefetch = 0 : i64, scratch_operands = 0 : i64, tpu.core_type = #tpu.core_type<tc>, window_params = [{transform_indices = @transform_0, window_bounds = array<i64: 16, 128>}, {pipeline_mode = #tpu.pipeline_mode<synchronous>, transform_indices = @transform_1, window_bounds = array<i64: 128, 128>}, {pipeline_mode = #tpu.pipeline_mode<synchronous>, transform_indices = @transform_2, window_bounds = array<i64: 128, 128>}, {pipeline_mode = #tpu.pipeline_mode<synchronous>, transform_indices = @transform_3, window_bounds = array<i64: 128, 128>}, {transform_indices = @transform_4, window_bounds = array<i64: 16, 128>}]} {
    %c0 = arith.constant 0 : index
    %c0_0 = arith.constant 0 : index
    %0 = vector.load %arg1[%c0, %c0_0] : memref<16x128xbf16, #tpu.memory_space<vmem>>, vector<16x128xbf16>
    %c0_1 = arith.constant 0 : index
    %c0_2 = arith.constant 0 : index
    %1 = vector.load %arg2[%c0_1, %c0_2] : memref<128x128xbf16, #tpu.memory_space<vmem>>, vector<128x128xbf16>
    %cst = arith.constant dense<0.000000e+00> : vector<16x128xf32>
    %2 = tpu.matmul %0, %1, %cst {dimension_numbers = #tpu.dot_dimension_numbers<[1], [0], [0], [1], [0, 0, 1, 1], [], []>} : vector<16x128xbf16>, vector<128x128xbf16>, vector<16x128xf32> -> vector<16x128xf32>
    %cst_3 = arith.constant 0.000000e+00 : f32
    %3 = vector.broadcast %cst_3 : f32 to vector<16x128xf32>
    %4 = arith.cmpf ogt, %2, %3 : vector<16x128xf32>
    %cst_4 = arith.constant 0.00999999977 : f32
    %5 = vector.broadcast %cst_4 : f32 to vector<16x128xf32>
    %6 = arith.mulf %5, %2 : vector<16x128xf32>
    %7 = arith.select %4, %2, %6 : vector<16x128xi1>, vector<16x128xf32>
    %8 = arith.truncf %7 : vector<16x128xf32> to vector<16x128xbf16>
    %c0_5 = arith.constant 0 : index
    %c0_6 = arith.constant 0 : index
    %9 = vector.load %arg3[%c0_5, %c0_6] : memref<128x128xbf16, #tpu.memory_space<vmem>>, vector<128x128xbf16>
    %cst_7 = arith.constant dense<0.000000e+00> : vector<16x128xf32>
    %10 = tpu.matmul %8, %9, %cst_7 {dimension_numbers = #tpu.dot_dimension_numbers<[1], [0], [0], [1], [0, 0, 1, 1], [], []>} : vector<16x128xbf16>, vector<128x128xbf16>, vector<16x128xf32> -> vector<16x128xf32>
    %cst_8 = arith.constant 0.000000e+00 : f32
    %11 = vector.broadcast %cst_8 : f32 to vector<16x128xf32>
    %12 = arith.cmpf ogt, %10, %11 : vector<16x128xf32>
    %cst_9 = arith.constant 0.00999999977 : f32
    %13 = vector.broadcast %cst_9 : f32 to vector<16x128xf32>
    %14 = arith.mulf %13, %10 : vector<16x128xf32>
    %15 = arith.select %12, %10, %14 : vector<16x128xi1>, vector<16x128xf32>
    %16 = arith.truncf %15 : vector<16x128xf32> to vector<16x128xbf16>
    %c0_10 = arith.constant 0 : index
    %c0_11 = arith.constant 0 : index
    %17 = vector.load %arg4[%c0_10, %c0_11] : memref<128x128xbf16, #tpu.memory_space<vmem>>, vector<128x128xbf16>
    %cst_12 = arith.constant dense<0.000000e+00> : vector<16x128xf32>
    %18 = tpu.matmul %16, %17, %cst_12 {dimension_numbers = #tpu.dot_dimension_numbers<[1], [0], [0], [1], [0, 0, 1, 1], [], []>} : vector<16x128xbf16>, vector<128x128xbf16>, vector<16x128xf32> -> vector<16x128xf32>
    %c0_13 = arith.constant 0 : index
    %c0_14 = arith.constant 0 : index
    %19 = vector.load %arg5[%c0_13, %c0_14] : memref<16x128xf32, #tpu.memory_space<vmem>>, vector<16x128xf32>
    tpu.vector_store %arg5[%c0_13, %c0_14], %18 {strides = array<i32>} : memref<16x128xf32, #tpu.memory_space<vmem>>, vector<16x128xf32>,
    return
  }
  func.func @transform_0(%arg0: i32) -> (i32, i32) {
    %c0_i32 = arith.constant 0 : i32
    %c0_i32_0 = arith.constant 0 : i32
    return %arg0, %c0_i32 : i32, i32
  }
  func.func @transform_1(%arg0: i32) -> (i32, i32) {
    %c0_i32 = arith.constant 0 : i32
    %c0_i32_0 = arith.constant 0 : i32
    %c0_i32_1 = arith.constant 0 : i32
    return %c0_i32, %c0_i32_0 : i32, i32
  }
  func.func @transform_2(%arg0: i32) -> (i32, i32) {
    %c0_i32 = arith.constant 0 : i32
    %c0_i32_0 = arith.constant 0 : i32
    %c0_i32_1 = arith.constant 0 : i32
    return %c0_i32, %c0_i32_0 : i32, i32
  }
  func.func @transform_3(%arg0: i32) -> (i32, i32) {
    %c0_i32 = arith.constant 0 : i32
    %c0_i32_0 = arith.constant 0 : i32
    %c0_i32_1 = arith.constant 0 : i32
    return %c0_i32, %c0_i32_0 : i32, i32
  }
  func.func @transform_4(%arg0: i32) -> (i32, i32) {
    %c0_i32 = arith.constant 0 : i32
    %c0_i32_0 = arith.constant 0 : i32
    return %arg0, %c0_i32 : i32, i32
  }
}

</mosaic_0001>

<llo_original>
// kernel: tpu_custom_call.1
$region0: #{tpu_custom_call.1}
  #allocation0 [shape = 'u32[]', space=smem, size = 0x4, offset = 0x4, fixed_abs, tag = 'smem constant byte address 0x4 - core index']
  #allocation1 [shape = 'u32[144,128]{1,0:T(1,128)}', space=vmem, size = 0x12000, scoped, tag = 'internal scratch']
  %s0 = inlined_call_operand.hbm [shape: bf16[16,128], index: 0, kind: input, shape index: {}]
  %s1 = inlined_call_operand.hbm [shape: bf16[128,128], index: 1, kind: input, shape index: {}]
  %s2 = inlined_call_operand.hbm [shape: bf16[128,128], index: 2, kind: input, shape index: {}]
  %s3 = inlined_call_operand.hbm [shape: bf16[128,128], index: 3, kind: input, shape index: {}]
  %s4 = inlined_call_operand.hbm [shape: f32[16,128], index: 4, kind: output, shape index: {}]
  %s5 = sld [smem:[#allocation0]]
  $region42: #{tpu_custom_call.1} parent=0
    _
  %s7 = ssub.s32 1, %s5
  %s8 = scalar_select 0, %s7, %s5
  $region1: #{tpu_custom_call.1} parent=0
    #allocation2 [shape = 'u8[4096]{0}', space=vmem, size = 0x1000, scoped, tag = 'input window, operand 0, single buffered']
    #allocation3 [shape = 's32[1]{0}', space=sflag, size = 0x4, scoped, tag = 'scoped memory for tpu_custom_call.1']
    #allocation4 [shape = 's32[1]{0}', space=sflag, size = 0x4, scoped, tag = 'scoped memory for tpu_custom_call.1']
    #allocation5 [shape = 'u8[32768]{0}', space=vmem, size = 0x8000, scoped, tag = 'input window, operand 1, single buffered']
    #allocation6 [shape = 's32[1]{0}', space=sflag, size = 0x4, scoped, tag = 'scoped memory for tpu_custom_call.1']
    #allocation7 [shape = 'u8[32768]{0}', space=vmem, size = 0x8000, scoped, tag = 'input window, operand 2, single buffered']
    #allocation8 [shape = 'u8[32768]{0}', space=vmem, size = 0x8000, scoped, tag = 'input window, operand 3, single buffered']
    #allocation9 [shape = 's32[1]{0}', space=sflag, size = 0x4, scoped, tag = 'scoped memory for tpu_custom_call.1']
    #allocation10 [shape = 'u8[8192]{0}', space=vmem, size = 0x2000, scoped, tag = 'output window, operand 0, single buffered']
    %9 = vsyncpa [#allocation3], 0
    %10 = vsyncpa [#allocation6], 0
    %11 = vsyncpa [#allocation9], 0
    %12 = vsyncpa [#allocation4], 0
    // Predicated region
    $region2: #{tpu_custom_call.1} parent=1 // pred_check
      _
    $region3: #{tpu_custom_call.1} parent=1 // pred_check_branch
      %14 = sbr.rel (0) target = $region5
    $region4: #{tpu_custom_call.1} parent=1 // pred_region
      %s16 = ssub.s32 128, 128
      %17 = vsyncadd [#allocation3], %s16
      %s18 = sshll.u32 [#allocation2], 4
      %s19 = int_to_ptr.vmem [resolvable:$true] %s18
      %24 = dma.hbm_to_vmem [thread:$0]  %s0, 128, %s19, [#allocation3], 64, 64, 4
    $region5: #{tpu_custom_call.1} parent=1 // pred_fallthru
      _
    // Predicated region
    $region6: #{tpu_custom_call.1} parent=1 // pred_check
      _
    $region7: #{tpu_custom_call.1} parent=1 // pred_check_branch
      %26 = sbr.rel (0) target = $region9
    $region8: #{tpu_custom_call.1} parent=1 // pred_region
      %s28 = ssub.s32 1024, 1024
      %29 = vsyncadd [#allocation6], %s28
      %s30 = sshll.u32 [#allocation5], 4
      %s31 = int_to_ptr.vmem [resolvable:$true] %s30
      %36 = dma.hbm_to_vmem [thread:$0]  %s1, 1024, %s31, [#allocation6], 64, 64, 4
    $region9: #{tpu_custom_call.1} parent=1 // pred_fallthru
      _
    // Predicated region
    $region10: #{tpu_custom_call.1} parent=1 // pred_check
      _
    $region11: #{tpu_custom_call.1} parent=1 // pred_check_branch
      %38 = sbr.rel (0) target = $region13
    $region12: #{tpu_custom_call.1} parent=1 // pred_region
      %s40 = ssub.s32 1024, 1024
      %41 = vsyncadd [#allocation6], %s40
      %s42 = sshll.u32 [#allocation7], 4
      %s43 = int_to_ptr.vmem [resolvable:$true] %s42
      %48 = dma.hbm_to_vmem [thread:$0]  %s2, 1024, %s43, [#allocation6], 64, 64, 4
    $region13: #{tpu_custom_call.1} parent=1 // pred_fallthru
      _
    // Predicated region
    $region14: #{tpu_custom_call.1} parent=1 // pred_check
      _
    $region15: #{tpu_custom_call.1} parent=1 // pred_check_branch
      %50 = sbr.rel (0) target = $region17
    $region16: #{tpu_custom_call.1} parent=1 // pred_region
      %s52 = ssub.s32 1024, 1024
      %53 = vsyncadd [#allocation9], %s52
      %s54 = sshll.u32 [#allocation8], 4
      %s55 = int_to_ptr.vmem [resolvable:$true] %s54
      %60 = dma.hbm_to_vmem [thread:$0]  %s3, 1024, %s55, [#allocation9], 64, 64, 4
    $region17: #{tpu_custom_call.1} parent=1 // pred_fallthru
      _
    // Predicated region
    $region18: #{tpu_custom_call.1} parent=1 // pred_check
      _
    $region19: #{tpu_custom_call.1} parent=1 // pred_check_branch
      %62 = sbr.rel (0) target = $region21
    $region20: #{tpu_custom_call.1} parent=1 // pred_region
      %63 = dma.done [#allocation3], 128
    $region21: #{tpu_custom_call.1} parent=1 // pred_fallthru
      _
    // Predicated region
    $region22: #{tpu_custom_call.1} parent=1 // pred_check
      _
    $region23: #{tpu_custom_call.1} parent=1 // pred_check_branch
      %65 = sbr.rel (0) target = $region25
    $region24: #{tpu_custom_call.1} parent=1 // pred_region
      %66 = dma.done [#allocation6], 1024
    $region25: #{tpu_custom_call.1} parent=1 // pred_fallthru
      _
    // Predicated region
    $region26: #{tpu_custom_call.1} parent=1 // pred_check
      _
    $region27: #{tpu_custom_call.1} parent=1 // pred_check_branch
      %68 = sbr.rel (0) target = $region29
    $region28: #{tpu_custom_call.1} parent=1 // pred_region
      %69 = dma.done [#allocation6], 1024
    $region29: #{tpu_custom_call.1} parent=1 // pred_fallthru
      _
    // Predicated region
    $region30: #{tpu_custom_call.1} parent=1 // pred_check
      _
    $region31: #{tpu_custom_call.1} parent=1 // pred_check_branch
      %71 = sbr.rel (0) target = $region33
    $region32: #{tpu_custom_call.1} parent=1 // pred_region
      %72 = dma.done [#allocation9], 1024
    $region33: #{tpu_custom_call.1} parent=1 // pred_fallthru
      _
    %v74 = vld [vmem:[#allocation2] sm:$0xf]
    %v75 = vld [vmem:[#allocation2 + $0x4] sm:$0xf]
    %v76 = vld [vmem:[#allocation5] sm:$0xf]
    %v77 = vld [vmem:[#allocation5 + $0x4] sm:$0xf]
    %v78 = vld [vmem:[#allocation5 + $0x8] sm:$0xf]
    %v79 = vld [vmem:[#allocation5 + $0xc] sm:$0xf]
    %v80 = vld [vmem:[#allocation5 + $0x10] sm:$0xf]
    %v81 = vld [vmem:[#allocation5 + $0x14] sm:$0xf]
    %v82 = vld [vmem:[#allocation5 + $0x18] sm:$0xf]
    %v83 = vld [vmem:[#allocation5 + $0x1c] sm:$0xf]
    %v84 = vld [vmem:[#allocation5 + $0x20] sm:$0xf]
    %v85 = vld [vmem:[#allocation5 + $0x24] sm:$0xf]
    %v86 = vld [vmem:[#allocation5 + $0x28] sm:$0xf]
    %v87 = vld [vmem:[#allocation5 + $0x2c] sm:$0xf]
    %v88 = vld [vmem:[#allocation5 + $0x30] sm:$0xf]
    %v89 = vld [vmem:[#allocation5 + $0x34] sm:$0xf]
    %v90 = vld [vmem:[#allocation5 + $0x38] sm:$0xf]
    %v91 = vld [vmem:[#allocation5 + $0x3c] sm:$0xf]
    %v94 = vunpack.c.l.b16 %v74
    %v95 = vunpack.c.l.b16 %v75
    %v96 = vpack.c.b16 %v95, %v94
    %v114 = vunpack.c.l.b16 %v76
    %v115 = vunpack.c.l.b16 %v77
    %v116 = vunpack.c.l.b16 %v78
    %v117 = vunpack.c.l.b16 %v79
    %v118 = vunpack.c.l.b16 %v80
    %v119 = vunpack.c.l.b16 %v81
    %v120 = vunpack.c.l.b16 %v82
    %v121 = vunpack.c.l.b16 %v83
    %v122 = vunpack.c.l.b16 %v84
    %v123 = vunpack.c.l.b16 %v85
    %v124 = vunpack.c.l.b16 %v86
    %v125 = vunpack.c.l.b16 %v87
    %v126 = vunpack.c.l.b16 %v88
    %v127 = vunpack.c.l.b16 %v89
    %v128 = vunpack.c.l.b16 %v90
    %v129 = vunpack.c.l.b16 %v91
    %v130 = vpack.c.b16 %v115, %v114
    %v131 = vpack.c.b16 %v117, %v116
    %v132 = vpack.c.b16 %v119, %v118
    %v133 = vpack.c.b16 %v121, %v120
    %v134 = vpack.c.b16 %v123, %v122
    %v135 = vpack.c.b16 %v125, %v124
    %v136 = vpack.c.b16 %v127, %v126
    %v137 = vpack.c.b16 %v129, %v128
    %146 = vmatprep.subr.bf16.mxu0 0
    %147 = vmatpush1.bf16.msra.mxu0 %v130
    %148 = vmatprep.subr.bf16.mxu0 0
    %149 = vmatpush1.bf16.msra.mxu0 %v131
    %150 = vmatprep.subr.bf16.mxu0 0
    %151 = vmatpush1.bf16.msra.mxu0 %v132
    %152 = vmatprep.subr.bf16.mxu0 0
    %153 = vmatpush1.bf16.msra.mxu0 %v133
    %154 = vmatprep.subr.bf16.mxu0 0
    %155 = vmatpush1.bf16.msra.mxu0 %v134
    %156 = vmatprep.subr.bf16.mxu0 0
    %157 = vmatpush1.bf16.msra.mxu0 %v135
    %158 = vmatprep.subr.bf16.mxu0 0
    %159 = vmatpush1.bf16.msra.mxu0 %v136
    %160 = vmatprep.subr.bf16.mxu0 0
    %161 = vmatpush1.bf16.msra.mxu0 %v137
    %162 = vmatprep.subr.bf16.mxu0 0
    %163 = vmatpush1.bf16.msra.mxu0 0
    %164 = vmatprep.subr.bf16.mxu0 0
    %165 = vmatpush1.bf16.msra.mxu0 0
    %166 = vmatprep.subr.bf16.mxu0 0
    %167 = vmatpush1.bf16.msra.mxu0 0
    %168 = vmatprep.subr.bf16.mxu0 0
    %169 = vmatpush1.bf16.msra.mxu0 0
    %170 = vmatprep.subr.bf16.mxu0 0
    %171 = vmatpush1.bf16.msra.mxu0 0
    %172 = vmatprep.subr.bf16.mxu0 0
    %173 = vmatpush1.bf16.msra.mxu0 0
    %174 = vmatprep.subr.bf16.mxu0 0
    %175 = vmatpush1.bf16.msra.mxu0 0
    %176 = vmatprep.subr.bf16.mxu0 0
    %177 = vmatpush1.bf16.msra.mxu0 0
    %178 = vmatprep.mubr.bf16.mxu0 0
    %179 = vmatmul.mubr.bf16.gmra.mrb[0].mxu0 %v96
    %v180 = vpop.f32.mrb[0].mxu0
    %v181 = vadd.f32 0.0, %v180
    %v182 = vpop.f32.mrb[0].mxu0
    %v183 = vpop.f32.mrb[0].mxu0
    %v184 = vadd.f32 0.0, %v183
    %v185 = vpop.f32.mrb[0].mxu0
    %186 = vdwg.mxu0
    %vm187 = vcmp.gt.f32.partialorder %v181, 0.0
    %vm188 = vcmp.gt.f32.partialorder %v184, 0.0
    %v189 = vmul.f32 %v181, 0.01
    %v190 = vmul.f32 %v184, 0.01
    %v191 = vsel %vm187, %v181, %v189
    %v192 = vsel %vm188, %v184, %v190
    %v193 = vpack.c.bf16 %v192, %v191
    %v194 = vld [vmem:[#allocation7] sm:$0xf]
    %v195 = vld [vmem:[#allocation7 + $0x4] sm:$0xf]
    %v196 = vld [vmem:[#allocation7 + $0x8] sm:$0xf]
    %v197 = vld [vmem:[#allocation7 + $0xc] sm:$0xf]
    %v198 = vld [vmem:[#allocation7 + $0x10] sm:$0xf]
    %v199 = vld [vmem:[#allocation7 + $0x14] sm:$0xf]
    %v200 = vld [vmem:[#allocation7 + $0x18] sm:$0xf]
    %v201 = vld [vmem:[#allocation7 + $0x1c] sm:$0xf]
    %v202 = vld [vmem:[#allocation7 + $0x20] sm:$0xf]
    %v203 = vld [vmem:[#allocation7 + $0x24] sm:$0xf]
    %v204 = vld [vmem:[#allocation7 + $0x28] sm:$0xf]
    %v205 = vld [vmem:[#allocation7 + $0x2c] sm:$0xf]
    %v206 = vld [vmem:[#allocation7 + $0x30] sm:$0xf]
    %v207 = vld [vmem:[#allocation7 + $0x34] sm:$0xf]
    %v208 = vld [vmem:[#allocation7 + $0x38] sm:$0xf]
    %v209 = vld [vmem:[#allocation7 + $0x3c] sm:$0xf]
    %v226 = vunpack.c.l.b16 %v194
    %v227 = vunpack.c.l.b16 %v195
    %v228 = vunpack.c.l.b16 %v196
    %v229 = vunpack.c.l.b16 %v197
    %v230 = vunpack.c.l.b16 %v198
    %v231 = vunpack.c.l.b16 %v199
    %v232 = vunpack.c.l.b16 %v200
    %v233 = vunpack.c.l.b16 %v201
    %v234 = vunpack.c.l.b16 %v202
    %v235 = vunpack.c.l.b16 %v203
    %v236 = vunpack.c.l.b16 %v204
    %v237 = vunpack.c.l.b16 %v205
    %v238 = vunpack.c.l.b16 %v206
    %v239 = vunpack.c.l.b16 %v207
    %v240 = vunpack.c.l.b16 %v208
    %v241 = vunpack.c.l.b16 %v209
    %v242 = vpack.c.b16 %v227, %v226
    %v243 = vpack.c.b16 %v229, %v228
    %v244 = vpack.c.b16 %v231, %v230
    %v245 = vpack.c.b16 %v233, %v232
    %v246 = vpack.c.b16 %v235, %v234
    %v247 = vpack.c.b16 %v237, %v236
    %v248 = vpack.c.b16 %v239, %v238
    %v249 = vpack.c.b16 %v241, %v240
    %258 = vmatprep.subr.bf16.mxu0 0
    %259 = vmatpush1.bf16.msra.mxu0 %v242
    %260 = vmatprep.subr.bf16.mxu0 0
    %261 = vmatpush1.bf16.msra.mxu0 %v243
    %262 = vmatprep.subr.bf16.mxu0 0
    %263 = vmatpush1.bf16.msra.mxu0 %v244
    %264 = vmatprep.subr.bf16.mxu0 0
    %265 = vmatpush1.bf16.msra.mxu0 %v245
    %266 = vmatprep.subr.bf16.mxu0 0
    %267 = vmatpush1.bf16.msra.mxu0 %v246
    %268 = vmatprep.subr.bf16.mxu0 0
    %269 = vmatpush1.bf16.msra.mxu0 %v247
    %270 = vmatprep.subr.bf16.mxu0 0
    %271 = vmatpush1.bf16.msra.mxu0 %v248
    %272 = vmatprep.subr.bf16.mxu0 0
    %273 = vmatpush1.bf16.msra.mxu0 %v249
    %274 = vmatprep.subr.bf16.mxu0 0
    %275 = vmatpush1.bf16.msra.mxu0 0
    %276 = vmatprep.subr.bf16.mxu0 0
    %277 = vmatpush1.bf16.msra.mxu0 0
    %278 = vmatprep.subr.bf16.mxu0 0
    %279 = vmatpush1.bf16.msra.mxu0 0
    %280 = vmatprep.subr.bf16.mxu0 0
    %281 = vmatpush1.bf16.msra.mxu0 0
    %282 = vmatprep.subr.bf16.mxu0 0
    %283 = vmatpush1.bf16.msra.mxu0 0
    %284 = vmatprep.subr.bf16.mxu0 0
    %285 = vmatpush1.bf16.msra.mxu0 0
    %286 = vmatprep.subr.bf16.mxu0 0
    %287 = vmatpush1.bf16.msra.mxu0 0
    %288 = vmatprep.subr.bf16.mxu0 0
    %289 = vmatpush1.bf16.msra.mxu0 0
    %290 = vmatprep.mubr.bf16.mxu0 0
    %291 = vmatmul.mubr.bf16.gmra.mrb[0].mxu0 %v193
    %v292 = vpop.f32.mrb[0].mxu0
    %v293 = vadd.f32 0.0, %v292
    %v294 = vpop.f32.mrb[0].mxu0
    %v295 = vpop.f32.mrb[0].mxu0
    %v296 = vadd.f32 0.0, %v295
    %v297 = vpop.f32.mrb[0].mxu0
    %298 = vdwg.mxu0
    %vm299 = vcmp.gt.f32.partialorder %v293, 0.0
    %vm300 = vcmp.gt.f32.partialorder %v296, 0.0
    %v301 = vmul.f32 %v293, 0.01
    %v302 = vmul.f32 %v296, 0.01
    %v303 = vsel %vm299, %v293, %v301
    %v304 = vsel %vm300, %v296, %v302
    %v305 = vpack.c.bf16 %v304, %v303
    %v306 = vld [vmem:[#allocation8] sm:$0xf]
    %v307 = vld [vmem:[#allocation8 + $0x4] sm:$0xf]
    %v308 = vld [vmem:[#allocation8 + $0x8] sm:$0xf]
    %v309 = vld [vmem:[#allocation8 + $0xc] sm:$0xf]
    %v310 = vld [vmem:[#allocation8 + $0x10] sm:$0xf]
    %v311 = vld [vmem:[#allocation8 + $0x14] sm:$0xf]
    %v312 = vld [vmem:[#allocation8 + $0x18] sm:$0xf]
    %v313 = vld [vmem:[#allocation8 + $0x1c] sm:$0xf]
    %v314 = vld [vmem:[#allocation8 + $0x20] sm:$0xf]
    %v315 = vld [vmem:[#allocation8 + $0x24] sm:$0xf]
    %v316 = vld [vmem:[#allocation8 + $0x28] sm:$0xf]
    %v317 = vld [vmem:[#allocation8 + $0x2c] sm:$0xf]
    %v318 = vld [vmem:[#allocation8 + $0x30] sm:$0xf]
    %v319 = vld [vmem:[#allocation8 + $0x34] sm:$0xf]
    %v320 = vld [vmem:[#allocation8 + $0x38] sm:$0xf]
    %v321 = vld [vmem:[#allocation8 + $0x3c] sm:$0xf]
    %v338 = vunpack.c.l.b16 %v306
    %v339 = vunpack.c.l.b16 %v307
    %v340 = vunpack.c.l.b16 %v308
    %v341 = vunpack.c.l.b16 %v309
    %v342 = vunpack.c.l.b16 %v310
    %v343 = vunpack.c.l.b16 %v311
    %v344 = vunpack.c.l.b16 %v312
    %v345 = vunpack.c.l.b16 %v313
    %v346 = vunpack.c.l.b16 %v314
    %v347 = vunpack.c.l.b16 %v315
    %v348 = vunpack.c.l.b16 %v316
    %v349 = vunpack.c.l.b16 %v317
    %v350 = vunpack.c.l.b16 %v318
    %v351 = vunpack.c.l.b16 %v319
    %v352 = vunpack.c.l.b16 %v320
    %v353 = vunpack.c.l.b16 %v321
    %v354 = vpack.c.b16 %v339, %v338
    %v355 = vpack.c.b16 %v341, %v340
    %v356 = vpack.c.b16 %v343, %v342
    %v357 = vpack.c.b16 %v345, %v344
    %v358 = vpack.c.b16 %v347, %v346
    %v359 = vpack.c.b16 %v349, %v348
    %v360 = vpack.c.b16 %v351, %v350
    %v361 = vpack.c.b16 %v353, %v352
    %370 = vmatprep.subr.bf16.mxu0 0
    %371 = vmatpush1.bf16.msra.mxu0 %v354
    %372 = vmatprep.subr.bf16.mxu0 0
    %373 = vmatpush1.bf16.msra.mxu0 %v355
    %374 = vmatprep.subr.bf16.mxu0 0
    %375 = vmatpush1.bf16.msra.mxu0 %v356
    %376 = vmatprep.subr.bf16.mxu0 0
    %377 = vmatpush1.bf16.msra.mxu0 %v357
    %378 = vmatprep.subr.bf16.mxu0 0
    %379 = vmatpush1.bf16.msra.mxu0 %v358
    %380 = vmatprep.subr.bf16.mxu0 0
    %381 = vmatpush1.bf16.msra.mxu0 %v359
    %382 = vmatprep.subr.bf16.mxu0 0
    %383 = vmatpush1.bf16.msra.mxu0 %v360
    %384 = vmatprep.subr.bf16.mxu0 0
    %385 = vmatpush1.bf16.msra.mxu0 %v361
    %386 = vmatprep.subr.bf16.mxu0 0
    %387 = vmatpush1.bf16.msra.mxu0 0
    %388 = vmatprep.subr.bf16.mxu0 0
    %389 = vmatpush1.bf16.msra.mxu0 0
    %390 = vmatprep.subr.bf16.mxu0 0
    %391 = vmatpush1.bf16.msra.mxu0 0
    %392 = vmatprep.subr.bf16.mxu0 0
    %393 = vmatpush1.bf16.msra.mxu0 0
    %394 = vmatprep.subr.bf16.mxu0 0
    %395 = vmatpush1.bf16.msra.mxu0 0
    %396 = vmatprep.subr.bf16.mxu0 0
    %397 = vmatpush1.bf16.msra.mxu0 0
    %398 = vmatprep.subr.bf16.mxu0 0
    %399 = vmatpush1.bf16.msra.mxu0 0
    %400 = vmatprep.subr.bf16.mxu0 0
    %401 = vmatpush1.bf16.msra.mxu0 0
    %402 = vmatprep.mubr.bf16.mxu0 0
    %403 = vmatmul.mubr.bf16.gmra.mrb[0].mxu0 %v305
    %v404 = vpop.f32.mrb[0].mxu0
    %v405 = vadd.f32 0.0, %v404
    %v406 = vpop.f32.mrb[0].mxu0
    %v407 = vpop.f32.mrb[0].mxu0
    %v408 = vadd.f32 0.0, %v407
    %v409 = vpop.f32.mrb[0].mxu0
    %410 = vdwg.mxu0
    %411 = vst [vmem:[#allocation10] sm:$0xff] %v405
    %412 = vst [vmem:[#allocation10 + $0x8] sm:$0xff] %v408
    // Predicated region
    $region34: #{tpu_custom_call.1} parent=1 // pred_check
      _
    $region35: #{tpu_custom_call.1} parent=1 // pred_check_branch
      %414 = sbr.rel (0) target = $region37
    $region36: #{tpu_custom_call.1} parent=1 // pred_region
      %s416 = ssub.s32 256, 256
      %417 = vsyncadd [#allocation4], %s416
      %s418 = sshll.u32 [#allocation10], 4
      %s419 = int_to_ptr.vmem [resolvable:$true] %s418
      %424 = dma.vmem_to_hbm [thread:$0]  %s419, 256, %s4, [#allocation4], 128, 128, 8
    $region37: #{tpu_custom_call.1} parent=1 // pred_fallthru
      _
    // Predicated region
    $region38: #{tpu_custom_call.1} parent=1 // pred_check
      _
    $region39: #{tpu_custom_call.1} parent=1 // pred_check_branch
      %426 = sbr.rel (0) target = $region41
    $region40: #{tpu_custom_call.1} parent=1 // pred_region
      %427 = dma.done [#allocation4], 256
    $region41: #{tpu_custom_call.1} parent=1 // pred_fallthru
      _
    %428 = vsyncpa [#allocation3], 1
    %429 = vsyncpa [#allocation6], 1
    %430 = vsyncpa [#allocation9], 1
    %431 = vsyncpa [#allocation4], 1

</llo_original>
